<compile_context>
chip_gen: v7x
topology: tpu7x:2x2x1
jax: 0.10.0
libtpu: 0.0.40
codegen_flags: <defaults>
</compile_context>

<pallas_src>
from functools import partial

import jax
import jax.numpy as jnp
from jax.experimental import pallas as pl
from jax.experimental.pallas import tpu as pltpu


def _round_up(x, m):
    return ((x + m - 1) // m) * m


def _additive_attention_kernel(q_ref, k_ref, v_ref, mask_ref, wq_ref, wk_ref,
                               we_ref, out_ref,
                               qh_scratch, m_scratch, l_scratch, acc_scratch,
                               energy_scratch,
                               *, seq_grid, compute_dtype, vector_dtype):
    s_idx = pl.program_id(1)

    TB = q_ref.shape[0]
    TS = k_ref.shape[1]
    Vd = v_ref.shape[2]
    H = wq_ref.shape[1]
    S_pad = energy_scratch.shape[1]
    P_ctx = _round_up(Vd, 128)
    P_attn = _round_up(S_pad, 128)
    assert P_ctx + P_attn == out_ref.shape[1]

    # ---- per-batch-block init: query projection + online-softmax state ----
    @pl.when(s_idx == 0)
    def _():
        q = q_ref[...].astype(compute_dtype)
        qh_scratch[...] = jnp.dot(q, wq_ref[...].astype(compute_dtype),
                                  preferred_element_type=jnp.float32)
        m_scratch[...] = jnp.full(m_scratch.shape, -jnp.inf, jnp.float32)
        l_scratch[...] = jnp.zeros(l_scratch.shape, jnp.float32)
        acc_scratch[...] = jnp.zeros(acc_scratch.shape, jnp.float32)

    # ---- key projection for this sequence tile: one plain MXU dispatch ----
    k_flat = k_ref[...].reshape(TB * TS, -1).astype(compute_dtype)
    k_hidden = jnp.dot(k_flat, wk_ref[...].astype(compute_dtype),
                       preferred_element_type=jnp.float32).reshape(TB, TS, H)

    # ---- tanh + energy projection (VPU/EUP; bf16 on v6e/v7x, f32 on v5e) ----
    t = jnp.tanh((qh_scratch[...][:, None, :] + k_hidden).astype(vector_dtype))
    we = we_ref[...].reshape(1, 1, H).astype(vector_dtype)
    energy = jnp.sum((t * we).astype(jnp.float32), axis=-1)        # (TB, TS) f32

    mask = mask_ref[...]
    energy = jnp.where(mask == 0, jnp.float32(-1e10), energy)

    # Stash masked energies so the final attention weights can be emitted exactly.
    if seq_grid == 1:
        energy_scratch[...] = energy
    else:
        off = pl.multiple_of(s_idx * TS, TS)
        energy_scratch[:, pl.ds(off, TS)] = energy

    # ---- online softmax update of (m, l, context accumulator) ----
    m_prev = m_scratch[...]
    m_new = jnp.maximum(m_prev, jnp.max(energy, axis=-1, keepdims=True))
    alpha = jnp.exp(m_prev - m_new)
    p = jnp.exp(energy - m_new)                                     # (TB, TS)
    l_scratch[...] = alpha * l_scratch[...] + jnp.sum(p, axis=-1, keepdims=True)
    v = v_ref[...].astype(jnp.float32)
    acc_scratch[...] = alpha * acc_scratch[...] + jnp.sum(p[:, :, None] * v, axis=1)
    m_scratch[...] = m_new

    # ---- finalize: normalize and pack both outputs (ctx | attn) lane-dense ----
    @pl.when(s_idx == seq_grid - 1)
    def _():
        inv_l = pl.reciprocal(l_scratch[...], approx=True)          # EUP slot
        ctx = acc_scratch[...] * inv_l                              # (TB, Vd)
        attn = jnp.exp(energy_scratch[...] - m_scratch[...]) * inv_l  # (TB, S_pad)
        parts = [ctx]
        if P_ctx > Vd:
            parts.append(jnp.zeros((TB, P_ctx - Vd), jnp.float32))
        parts.append(attn)                                          # 128-aligned start
        if P_attn > S_pad:
            parts.append(jnp.zeros((TB, P_attn - S_pad), jnp.float32))
        out_ref[...] = jnp.concatenate(parts, axis=-1).astype(out_ref.dtype)


def _vmem_limit_bytes():
    cap = 64 * 1024 * 1024                     # conservative fallback (v7x per-TC)
    try:
        info = pltpu.get_tpu_info()
        cap = int(getattr(info, "vmem_capacity_bytes", cap))
    except Exception:
        pass
    # ~3/4 of physical, capped: ~48 MiB on v7x, ~96 MiB on v5e/v6e.
    return int(min(cap * 3 // 4, 100 * 1024 * 1024))


def _default_vector_dtype():
    try:
        kind = jax.devices()[0].device_kind.lower()
    except Exception:
        return jnp.float32
    if "v6" in kind or "v7" in kind:
        return jnp.bfloat16                    # bf16-capable VPU/EUP
    return jnp.float32                         # v5e and older: keep f32 vector path


def _choose_tiles(B, S, Qd, Kd, Vd, H, vmem_limit):
    S8 = _round_up(max(S, 1), 8)
    # Full S resident when small; otherwise a 128-multiple tile keeps blocked
    # mask/k/v specs (8,128)-legal.
    TS = S8 if S8 <= 512 else 512
    S_pad = _round_up(S8, TS)
    P = _round_up(Vd, 128) + _round_up(S_pad, 128)

    # Rough per-batch-row f32-byte footprint of one pipelined grid step.
    per_row = 4 * (2 * TS * (Kd + Vd + 1)      # double-buffered K / V / mask tiles
                   + 2 * TS * H                # k_hidden + tanh intermediate
                   + H + Vd + 2 + S_pad        # qh / acc / m / l / energy scratch
                   + 2 * P + 2 * Qd)           # packed output + query tile
    budget = max(vmem_limit // 2, 4 * 1024 * 1024)
    TB = max(8, min(256, (budget // per_row) // 8 * 8))
    TB = min(TB, _round_up(B, 8))
    B_pad = _round_up(B, TB)
    return TB, TS, B_pad, S_pad


def additive_attention(query, key, value, mask, wq, wk, we,
                       compute_dtype=jnp.float32, vector_dtype=None):
    if vector_dtype is None:
        vector_dtype = _default_vector_dtype()

    B, Qd = query.shape
    _, S, Kd = key.shape
    Vd = value.shape[-1]
    H = wq.shape[0]

    if mask is None:
        mask = jnp.ones((B, S), jnp.int32)
    mask = mask.astype(jnp.int32)

    vmem_limit = _vmem_limit_bytes()
    TB, TS, B_pad, S_pad = _choose_tiles(B, S, Qd, Kd, Vd, H, vmem_limit)

    # Host-side padding: sequence up to a multiple of TS (pad positions masked),
    # batch up to a multiple of TB (pad rows fully masked, discarded at the end).
    if S_pad != S:
        ds = S_pad - S
        key = jnp.pad(key, ((0, 0), (0, ds), (0, 0)))
        value = jnp.pad(value, ((0, 0), (0, ds), (0, 0)))
        mask = jnp.pad(mask, ((0, 0), (0, ds)))
    if B_pad != B:
        db = B_pad - B
        query = jnp.pad(query, ((0, db), (0, 0)))
        key = jnp.pad(key, ((0, db), (0, 0), (0, 0)))
        value = jnp.pad(value, ((0, db), (0, 0), (0, 0)))
        mask = jnp.pad(mask, ((0, db), (0, 0)))

    # nn.Linear computes y = x @ W^T: pre-transpose once on the host.
    wq_t = wq.T                                 # (Qd, H)
    wk_t = wk.T                                 # (Kd, H)

    grid_b = B_pad // TB
    grid_s = S_pad // TS
    P_ctx = _round_up(Vd, 128)
    P = P_ctx + _round_up(S_pad, 128)

    grid_spec = pltpu.PrefetchScalarGridSpec(
        num_scalar_prefetch=0,
        grid=(grid_b, grid_s),
        in_specs=[
            pl.BlockSpec((TB, Qd), lambda b, s: (b, 0)),
            pl.BlockSpec((TB, TS, Kd), lambda b, s: (b, s, 0)),
            pl.BlockSpec((TB, TS, Vd), lambda b, s: (b, s, 0)),
            pl.BlockSpec((TB, TS), lambda b, s: (b, s)),
            pl.BlockSpec((Qd, H), lambda b, s: (0, 0)),   # weights stay resident
            pl.BlockSpec((Kd, H), lambda b, s: (0, 0)),
            pl.BlockSpec((1, H), lambda b, s: (0, 0)),
        ],
        out_specs=pl.BlockSpec((TB, P), lambda b, s: (b, 0)),
        scratch_shapes=[
            pltpu.VMEM((TB, H), jnp.float32),      # query projection (resident)
            pltpu.VMEM((TB, 1), jnp.float32),      # running max m
            pltpu.VMEM((TB, 1), jnp.float32),      # running denominator l
            pltpu.VMEM((TB, Vd), jnp.float32),     # context accumulator
            pltpu.VMEM((TB, S_pad), jnp.float32),  # masked energies (for attn output)
        ],
    )

    kernel = partial(_additive_attention_kernel, seq_grid=grid_s,
                     compute_dtype=compute_dtype, vector_dtype=vector_dtype)

    packed = pl.pallas_call(
        kernel,
        out_shape=jax.ShapeDtypeStruct((B_pad, P), jnp.float32),
        grid_spec=grid_spec,
        compiler_params=pltpu.CompilerParams(
            dimension_semantics=("parallel", "arbitrary"),
            vmem_limit_bytes=vmem_limit,
        ),
    )(query, key, value, mask, wq_t, wk_t, we)

    ctx = packed[:B, :Vd]
    attn = packed[:B, P_ctx:P_ctx + S]
    return ctx, attn


def xavier_uniform(key, shape):
    # nn.init.xavier_uniform_ for a Linear weight of shape (fan_out, fan_in)
    fan_out, fan_in = shape
    bound = (6.0 / (fan_in + fan_out)) ** 0.5
    return jax.random.uniform(key, shape, jnp.float32, -bound, bound)


def reference(query, key, value, mask, wq, wk, we):
    q_hidden = query @ wq.T                                    # (B, H)
    k_hidden = jnp.einsum('bsk,hk->bsh', key, wk)              # (B, S, H)
    energy = jnp.einsum('bsh,h->bs',
                        jnp.tanh(q_hidden[:, None, :] + k_hidden), we[0])
    energy = jnp.where(mask == 0, -1e10, energy)
    attn = jax.nn.softmax(energy, axis=1)
    ctx = jnp.einsum('bs,bsv->bv', attn, value)
    return ctx, attn


if __name__ == "__main__":
    root = jax.random.PRNGKey(0)
    keys = jax.random.split(root, 12)

    # ---- case 1: the module's toy shapes ----
    B, S, Qd, Kd, Vd, H = 2, 8, 32, 32, 32, 32
    query = jax.random.normal(keys[0], (B, Qd), jnp.float32)
    key = jax.random.normal(keys[1], (B, S, Kd), jnp.float32)
    value = jax.random.normal(keys[2], (B, S, Vd), jnp.float32)
    mask = jnp.ones((B, S), jnp.int32).at[1, -2:].set(0)   # batch 1: last 2 padded
    wq = xavier_uniform(keys[3], (H, Qd))
    wk = xavier_uniform(keys[4], (H, Kd))
    we = xavier_uniform(keys[5], (1, H))

    ctx_ref, attn_ref = reference(query, key, value, mask, wq, wk, we)

    # f32 MXU + f32 vector path (tolerance accounts for approx-reciprocal softmax norm)
    ctx, attn = additive_attention(query, key, value, mask, wq, wk, we,
                                   compute_dtype=jnp.float32,
                                   vector_dtype=jnp.float32)
    jax.block_until_ready((ctx, attn))
    assert ctx.shape == (B, Vd) and attn.shape == (B, S)
    assert jnp.allclose(ctx, ctx_ref, atol=5e-3, rtol=5e-3)
    assert jnp.allclose(attn, attn_ref, atol=5e-3, rtol=5e-3)
    assert jnp.allclose(jnp.sum(attn, axis=-1), 1.0, atol=5e-3)

    # bf16 MXU + bf16 tanh path (v6e/v7x fast path; softmax stays f32) — loose check.
    ctx_bf, attn_bf = additive_attention(query, key, value, mask, wq, wk, we,
                                         compute_dtype=jnp.bfloat16,
                                         vector_dtype=jnp.bfloat16)
    jax.block_until_ready((ctx_bf, attn_bf))
    assert jnp.allclose(ctx_bf, ctx_ref, atol=1e-1, rtol=1e-1)
    assert jnp.allclose(attn_bf, attn_ref, atol=1e-1, rtol=1e-1)

    # ---- case 2: ragged shapes exercise batch/sequence padding + distinct dims ----
    B2, S2, Qd2, Kd2, Vd2, H2 = 5, 12, 24, 40, 16, 48
    q2 = jax.random.normal(keys[6], (B2, Qd2), jnp.float32)
    k2 = jax.random.normal(keys[7], (B2, S2, Kd2), jnp.float32)
    v2 = jax.random.normal(keys[8], (B2, S2, Vd2), jnp.float32)
    m2 = jnp.ones((B2, S2), jnp.int32).at[0, -3:].set(0)
    wq2 = xavier_uniform(keys[9], (H2, Qd2))
    wk2 = xavier_uniform(keys[10], (H2, Kd2))
    we2 = xavier_uniform(keys[11], (1, H2))

    ctx2_ref, attn2_ref = reference(q2, k2, v2, m2, wq2, wk2, we2)
    ctx2, attn2 = additive_attention(q2, k2, v2, m2, wq2, wk2, we2,
                                     compute_dtype=jnp.float32,
                                     vector_dtype=jnp.float32)
    jax.block_until_ready((ctx2, attn2))
    assert ctx2.shape == (B2, Vd2) and attn2.shape == (B2, S2)
    assert jnp.allclose(ctx2, ctx2_ref, atol=5e-3, rtol=5e-3)
    assert jnp.allclose(attn2, attn2_ref, atol=5e-3, rtol=5e-3)

    print("KERNEL_OK")
</pallas_src>

<mosaic_0001>
module attributes {stable_mosaic.version = 11 : i64} {
  func.func @_additive_attention_kernel(%arg0: i32, %arg1: i32, %arg2: memref<8x32xf32, #tpu.memory_space<vmem>>, %arg3: memref<8x8x32xf32, #tpu.memory_space<vmem>>, %arg4: memref<8x8x32xf32, #tpu.memory_space<vmem>>, %arg5: memref<8x8xi32, #tpu.memory_space<vmem>>, %arg6: memref<32x32xf32, #tpu.memory_space<vmem>>, %arg7: memref<32x32xf32, #tpu.memory_space<vmem>>, %arg8: memref<1x32xf32, #tpu.memory_space<vmem>>, %arg9: memref<8x256xf32, #tpu.memory_space<vmem>>, %arg10: memref<8x32xf32, #tpu.memory_space<vmem>>, %arg11: memref<8x1xf32, #tpu.memory_space<vmem>>, %arg12: memref<8x1xf32, #tpu.memory_space<vmem>>, %arg13: memref<8x32xf32, #tpu.memory_space<vmem>>, %arg14: memref<8x8xf32, #tpu.memory_space<vmem>>) attributes {dimension_semantics = [#tpu.dimension_semantics<parallel>, #tpu.dimension_semantics<arbitrary>], iteration_bounds = array<i64: 1, 1>, scalar_prefetch = 0 : i64, scratch_operands = 5 : i64, tpu.core_type = #tpu.core_type<tc>, window_params = [{transform_indices = @transform_0, window_bounds = array<i64: 8, 32>}, {transform_indices = @transform_1, window_bounds = array<i64: 8, 8, 32>}, {transform_indices = @transform_2, window_bounds = array<i64: 8, 8, 32>}, {transform_indices = @transform_3, window_bounds = array<i64: 8, 8>}, {pipeline_mode = #tpu.pipeline_mode<synchronous>, transform_indices = @transform_4, window_bounds = array<i64: 32, 32>}, {pipeline_mode = #tpu.pipeline_mode<synchronous>, transform_indices = @transform_5, window_bounds = array<i64: 32, 32>}, {pipeline_mode = #tpu.pipeline_mode<synchronous>, transform_indices = @transform_6, window_bounds = array<i64: 1, 32>}, {transform_indices = @transform_7, window_bounds = array<i64: 8, 256>}]} {
    %c0_i32 = arith.constant 0 : i32
    %0 = arith.cmpi eq, %arg1, %c0_i32 : i32
    %1 = arith.extui %0 : i1 to i32
    %c0_i32_0 = arith.constant 0 : i32
    %2 = arith.cmpi ne, %1, %c0_i32_0 : i32
    scf.if %2 {
      %c0_36 = arith.constant 0 : index
      %c0_37 = arith.constant 0 : index
      %53 = vector.load %arg2[%c0_36, %c0_37] : memref<8x32xf32, #tpu.memory_space<vmem>>, vector<8x32xf32>
      %c0_38 = arith.constant 0 : index
      %c0_39 = arith.constant 0 : index
      %54 = vector.load %arg6[%c0_38, %c0_39] : memref<32x32xf32, #tpu.memory_space<vmem>>, vector<32x32xf32>
      %cst_40 = arith.constant dense<0.000000e+00> : vector<8x32xf32>
      %55 = tpu.matmul %53, %54, %cst_40 {dimension_numbers = #tpu.dot_dimension_numbers<[1], [0], [0], [1], [0, 0, 1, 1], [], []>} : vector<8x32xf32>, vector<32x32xf32>, vector<8x32xf32> -> vector<8x32xf32>
      %c0_41 = arith.constant 0 : index
      %c0_42 = arith.constant 0 : index
      %56 = vector.load %arg10[%c0_41, %c0_42] : memref<8x32xf32, #tpu.memory_space<vmem>>, vector<8x32xf32>
      tpu.vector_store %arg10[%c0_41, %c0_42], %55 {strides = array<i32>} : memref<8x32xf32, #tpu.memory_space<vmem>>, vector<8x32xf32>,
      %cst_43 = arith.constant 0xFF800000 : f32
      %57 = vector.broadcast %cst_43 : f32 to vector<8x1xf32>
      %c0_44 = arith.constant 0 : index
      %c0_45 = arith.constant 0 : index
      %58 = vector.load %arg11[%c0_44, %c0_45] : memref<8x1xf32, #tpu.memory_space<vmem>>, vector<8x1xf32>
      tpu.vector_store %arg11[%c0_44, %c0_45], %57 {strides = array<i32>} : memref<8x1xf32, #tpu.memory_space<vmem>>, vector<8x1xf32>,
      %cst_46 = arith.constant 0.000000e+00 : f32
      %59 = vector.broadcast %cst_46 : f32 to vector<8x1xf32>
      %c0_47 = arith.constant 0 : index
      %c0_48 = arith.constant 0 : index
      %60 = vector.load %arg12[%c0_47, %c0_48] : memref<8x1xf32, #tpu.memory_space<vmem>>, vector<8x1xf32>
      tpu.vector_store %arg12[%c0_47, %c0_48], %59 {strides = array<i32>} : memref<8x1xf32, #tpu.memory_space<vmem>>, vector<8x1xf32>,
      %cst_49 = arith.constant 0.000000e+00 : f32
      %61 = vector.broadcast %cst_49 : f32 to vector<8x32xf32>
      %c0_50 = arith.constant 0 : index
      %c0_51 = arith.constant 0 : index
      %62 = vector.load %arg13[%c0_50, %c0_51] : memref<8x32xf32, #tpu.memory_space<vmem>>, vector<8x32xf32>
      tpu.vector_store %arg13[%c0_50, %c0_51], %61 {strides = array<i32>} : memref<8x32xf32, #tpu.memory_space<vmem>>, vector<8x32xf32>,
    } else {
    }
    %c0 = arith.constant 0 : index
    %c0_1 = arith.constant 0 : index
    %c0_2 = arith.constant 0 : index
    %3 = vector.load %arg3[%c0, %c0_1, %c0_2] : memref<8x8x32xf32, #tpu.memory_space<vmem>>, vector<8x8x32xf32>
    %4 = vector.shape_cast %3 : vector<8x8x32xf32> to vector<64x32xf32>
    %c0_3 = arith.constant 0 : index
    %c0_4 = arith.constant 0 : index
    %5 = vector.load %arg7[%c0_3, %c0_4] : memref<32x32xf32, #tpu.memory_space<vmem>>, vector<32x32xf32>
    %cst = arith.constant dense<0.000000e+00> : vector<64x32xf32>
    %6 = tpu.matmul %4, %5, %cst {dimension_numbers = #tpu.dot_dimension_numbers<[1], [0], [0], [1], [0, 0, 1, 1], [], []>} : vector<64x32xf32>, vector<32x32xf32>, vector<64x32xf32> -> vector<64x32xf32>
    %7 = vector.shape_cast %6 : vector<64x32xf32> to vector<8x8x32xf32>
    %c0_5 = arith.constant 0 : index
    %c0_6 = arith.constant 0 : index
    %8 = vector.load %arg10[%c0_5, %c0_6] : memref<8x32xf32, #tpu.memory_space<vmem>>, vector<8x32xf32>
    %9 = vector.shape_cast %8 : vector<8x32xf32> to vector<8x1x32xf32>
    %10 = vector.broadcast %9 : vector<8x1x32xf32> to vector<8x8x32xf32>
    %11 = arith.addf %10, %7 : vector<8x8x32xf32>
    %12 = math.tanh %11 : vector<8x8x32xf32>
    %c0_7 = arith.constant 0 : index
    %c0_8 = arith.constant 0 : index
    %13 = vector.load %arg8[%c0_7, %c0_8] : memref<1x32xf32, #tpu.memory_space<vmem>>, vector<1x32xf32>
    %14 = vector.shape_cast %13 : vector<1x32xf32> to vector<1x1x32xf32>
    %15 = vector.broadcast %14 : vector<1x1x32xf32> to vector<8x8x32xf32>
    %16 = arith.mulf %12, %15 : vector<8x8x32xf32>
    %cst_9 = arith.constant dense<0.000000e+00> : vector<8x8xf32>
    %17 = vector.multi_reduction <add>, %16, %cst_9 [2] : vector<8x8x32xf32> to vector<8x8xf32>
    %c0_10 = arith.constant 0 : index
    %c0_11 = arith.constant 0 : index
    %18 = vector.load %arg5[%c0_10, %c0_11] : memref<8x8xi32, #tpu.memory_space<vmem>>, vector<8x8xi32>
    %c0_i32_12 = arith.constant 0 : i32
    %19 = vector.broadcast %c0_i32_12 : i32 to vector<8x8xi32>
    %20 = arith.cmpi eq, %18, %19 : vector<8x8xi32>
    %cst_13 = arith.constant -1.000000e+10 : f32
    %21 = vector.broadcast %cst_13 : f32 to vector<8x8xf32>
    %22 = arith.select %20, %21, %17 : vector<8x8xi1>, vector<8x8xf32>
    %c0_14 = arith.constant 0 : index
    %c0_15 = arith.constant 0 : index
    %23 = vector.load %arg14[%c0_14, %c0_15] : memref<8x8xf32, #tpu.memory_space<vmem>>, vector<8x8xf32>
    tpu.vector_store %arg14[%c0_14, %c0_15], %22 {strides = array<i32>} : memref<8x8xf32, #tpu.memory_space<vmem>>, vector<8x8xf32>,
    %c0_16 = arith.constant 0 : index
    %c0_17 = arith.constant 0 : index
    %24 = vector.load %arg11[%c0_16, %c0_17] : memref<8x1xf32, #tpu.memory_space<vmem>>, vector<8x1xf32>
    %cst_18 = arith.constant dense<0xFF800000> : vector<8xf32>
    %25 = vector.multi_reduction <maximumf>, %22, %cst_18 [1] : vector<8x8xf32> to vector<8xf32>
    %26 = vector.shape_cast %25 : vector<8xf32> to vector<8x1xf32>
    %27 = arith.maximumf %24, %26 : vector<8x1xf32>
    %28 = arith.subf %24, %27 : vector<8x1xf32>
    %29 = math.exp %28 : vector<8x1xf32>
    %30 = vector.broadcast %27 : vector<8x1xf32> to vector<8x8xf32>
    %31 = arith.subf %22, %30 : vector<8x8xf32>
    %32 = math.exp %31 : vector<8x8xf32>
    %c0_19 = arith.constant 0 : index
    %c0_20 = arith.constant 0 : index
    %33 = vector.load %arg12[%c0_19, %c0_20] : memref<8x1xf32, #tpu.memory_space<vmem>>, vector<8x1xf32>
    %34 = arith.mulf %29, %33 : vector<8x1xf32>
    %cst_21 = arith.constant dense<0.000000e+00> : vector<8xf32>
    %35 = vector.multi_reduction <add>, %32, %cst_21 [1] : vector<8x8xf32> to vector<8xf32>
    %36 = vector.shape_cast %35 : vector<8xf32> to vector<8x1xf32>
    %37 = arith.addf %34, %36 : vector<8x1xf32>
    %c0_22 = arith.constant 0 : index
    %c0_23 = arith.constant 0 : index
    %38 = vector.load %arg12[%c0_22, %c0_23] : memref<8x1xf32, #tpu.memory_space<vmem>>, vector<8x1xf32>
    tpu.vector_store %arg12[%c0_22, %c0_23], %37 {strides = array<i32>} : memref<8x1xf32, #tpu.memory_space<vmem>>, vector<8x1xf32>,
    %c0_24 = arith.constant 0 : index
    %c0_25 = arith.constant 0 : index
    %c0_26 = arith.constant 0 : index
    %39 = vector.load %arg4[%c0_24, %c0_25, %c0_26] : memref<8x8x32xf32, #tpu.memory_space<vmem>>, vector<8x8x32xf32>
    %c0_27 = arith.constant 0 : index
    %c0_28 = arith.constant 0 : index
    %40 = vector.load %arg13[%c0_27, %c0_28] : memref<8x32xf32, #tpu.memory_space<vmem>>, vector<8x32xf32>
    %41 = vector.broadcast %29 : vector<8x1xf32> to vector<8x32xf32>
    %42 = arith.mulf %41, %40 : vector<8x32xf32>
    %43 = vector.shape_cast %32 : vector<8x8xf32> to vector<8x8x1xf32>
    %44 = vector.broadcast %43 : vector<8x8x1xf32> to vector<8x8x32xf32>
    %45 = arith.mulf %44, %39 : vector<8x8x32xf32>
    %cst_29 = arith.constant dense<0.000000e+00> : vector<8x32xf32>
    %46 = vector.multi_reduction <add>, %45, %cst_29 [1] : vector<8x8x32xf32> to vector<8x32xf32>
    %47 = arith.addf %42, %46 : vector<8x32xf32>
    %c0_30 = arith.constant 0 : index
    %c0_31 = arith.constant 0 : index
    %48 = vector.load %arg13[%c0_30, %c0_31] : memref<8x32xf32, #tpu.memory_space<vmem>>, vector<8x32xf32>
    tpu.vector_store %arg13[%c0_30, %c0_31], %47 {strides = array<i32>} : memref<8x32xf32, #tpu.memory_space<vmem>>, vector<8x32xf32>,
    %c0_32 = arith.constant 0 : index
    %c0_33 = arith.constant 0 : index
    %49 = vector.load %arg11[%c0_32, %c0_33] : memref<8x1xf32, #tpu.memory_space<vmem>>, vector<8x1xf32>
    tpu.vector_store %arg11[%c0_32, %c0_33], %27 {strides = array<i32>} : memref<8x1xf32, #tpu.memory_space<vmem>>, vector<8x1xf32>,
    %c0_i32_34 = arith.constant 0 : i32
    %50 = arith.cmpi eq, %arg1, %c0_i32_34 : i32
    %51 = arith.extui %50 : i1 to i32
    %c0_i32_35 = arith.constant 0 : i32
    %52 = arith.cmpi ne, %51, %c0_i32_35 : i32
    scf.if %52 {
      %c0_36 = arith.constant 0 : index
      %c0_37 = arith.constant 0 : index
      %53 = vector.load %arg12[%c0_36, %c0_37] : memref<8x1xf32, #tpu.memory_space<vmem>>, vector<8x1xf32>
      %54 = tpu.reciprocal %53 {approx = true} : vector<8x1xf32> -> vector<8x1xf32>
      %c0_38 = arith.constant 0 : index
      %c0_39 = arith.constant 0 : index
      %55 = vector.load %arg13[%c0_38, %c0_39] : memref<8x32xf32, #tpu.memory_space<vmem>>, vector<8x32xf32>
      %56 = vector.broadcast %54 : vector<8x1xf32> to vector<8x32xf32>
      %57 = arith.mulf %55, %56 : vector<8x32xf32>
      %c0_40 = arith.constant 0 : index
      %c0_41 = arith.constant 0 : index
      %58 = vector.load %arg14[%c0_40, %c0_41] : memref<8x8xf32, #tpu.memory_space<vmem>>, vector<8x8xf32>
      %c0_42 = arith.constant 0 : index
      %c0_43 = arith.constant 0 : index
      %59 = vector.load %arg11[%c0_42, %c0_43] : memref<8x1xf32, #tpu.memory_space<vmem>>, vector<8x1xf32>
      %60 = vector.broadcast %59 : vector<8x1xf32> to vector<8x8xf32>
      %61 = arith.subf %58, %60 : vector<8x8xf32>
      %62 = math.exp %61 : vector<8x8xf32>
      %63 = vector.broadcast %54 : vector<8x1xf32> to vector<8x8xf32>
      %64 = arith.mulf %62, %63 : vector<8x8xf32>
      %cst_44 = arith.constant 0.000000e+00 : f32
      %65 = vector.broadcast %cst_44 : f32 to vector<8x96xf32>
      %cst_45 = arith.constant 0.000000e+00 : f32
      %66 = vector.broadcast %cst_45 : f32 to vector<8x120xf32>
      %67 = tpu.concatenate %57, %65, %64, %66 in 1 : vector<8x32xf32>, vector<8x96xf32>, vector<8x8xf32>, vector<8x120xf32> -> vector<8x256xf32>
      %c0_46 = arith.constant 0 : index
      %c0_47 = arith.constant 0 : index
      %68 = vector.load %arg9[%c0_46, %c0_47] : memref<8x256xf32, #tpu.memory_space<vmem>>, vector<8x256xf32>
      tpu.vector_store %arg9[%c0_46, %c0_47], %67 {strides = array<i32>} : memref<8x256xf32, #tpu.memory_space<vmem>>, vector<8x256xf32>,
    } else {
    }
    return
  }
  func.func @transform_0(%arg0: i32, %arg1: i32) -> (i32, i32) {
    %c0_i32 = arith.constant 0 : i32
    %c0_i32_0 = arith.constant 0 : i32
    return %arg0, %c0_i32 : i32, i32
  }
  func.func @transform_1(%arg0: i32, %arg1: i32) -> (i32, i32, i32) {
    %c0_i32 = arith.constant 0 : i32
    %c0_i32_0 = arith.constant 0 : i32
    return %arg0, %arg1, %c0_i32 : i32, i32, i32
  }
  func.func @transform_2(%arg0: i32, %arg1: i32) -> (i32, i32, i32) {
    %c0_i32 = arith.constant 0 : i32
    %c0_i32_0 = arith.constant 0 : i32
    return %arg0, %arg1, %c0_i32 : i32, i32, i32
  }
  func.func @transform_3(%arg0: i32, %arg1: i32) -> (i32, i32) {
    %c0_i32 = arith.constant 0 : i32
    return %arg0, %arg1 : i32, i32
  }
  func.func @transform_4(%arg0: i32, %arg1: i32) -> (i32, i32) {
    %c0_i32 = arith.constant 0 : i32
    %c0_i32_0 = arith.constant 0 : i32
    %c0_i32_1 = arith.constant 0 : i32
    return %c0_i32, %c0_i32_0 : i32, i32
  }
  func.func @transform_5(%arg0: i32, %arg1: i32) -> (i32, i32) {
    %c0_i32 = arith.constant 0 : i32
    %c0_i32_0 = arith.constant 0 : i32
    %c0_i32_1 = arith.constant 0 : i32
    return %c0_i32, %c0_i32_0 : i32, i32
  }
  func.func @transform_6(%arg0: i32, %arg1: i32) -> (i32, i32) {
    %c0_i32 = arith.constant 0 : i32
    %c0_i32_0 = arith.constant 0 : i32
    %c0_i32_1 = arith.constant 0 : i32
    return %c0_i32, %c0_i32_0 : i32, i32
  }
  func.func @transform_7(%arg0: i32, %arg1: i32) -> (i32, i32) {
    %c0_i32 = arith.constant 0 : i32
    %c0_i32_0 = arith.constant 0 : i32
    return %arg0, %c0_i32 : i32, i32
  }
}

</mosaic_0001>

<llo_original>
// kernel: tpu_custom_call.1
$region0: #{tpu_custom_call.1}
  #allocation0 [shape = 'u32[]', space=smem, size = 0x4, offset = 0x4, fixed_abs, tag = 'smem constant byte address 0x4 - core index']
  #allocation1 [shape = 'u32[144,128]{1,0:T(1,128)}', space=vmem, size = 0x12000, scoped, tag = 'internal scratch']
  #allocation2 [shape = 'f32[8,32]{1,0:T(8,128)}', space=vmem, size = 0x1000, scoped, tag = 'scratch operand']
  #allocation3 [shape = 'f32[8,1]{1,0:T(8,128)}', space=vmem, size = 0x1000, scoped, tag = 'scratch operand']
  #allocation4 [shape = 'f32[8,1]{1,0:T(8,128)}', space=vmem, size = 0x1000, scoped, tag = 'scratch operand']
  #allocation5 [shape = 'f32[8,32]{1,0:T(8,128)}', space=vmem, size = 0x1000, scoped, tag = 'scratch operand']
  #allocation6 [shape = 'f32[8,8]{1,0:T(8,128)}', space=vmem, size = 0x1000, scoped, tag = 'scratch operand']
  %s0 = inlined_call_operand.hbm [shape: f32[8,32], index: 0, kind: input, shape index: {}]
  %s1 = inlined_call_operand.hbm [shape: f32[8,8,32], index: 1, kind: input, shape index: {}]
  %s2 = inlined_call_operand.hbm [shape: f32[8,8,32], index: 2, kind: input, shape index: {}]
  %s3 = inlined_call_operand.vmem [shape: s32[8,8], index: 3, kind: input, shape index: {}]
  %s4 = inlined_call_operand.hbm [shape: f32[32,32], index: 4, kind: input, shape index: {}]
  %s5 = inlined_call_operand.hbm [shape: f32[32,32], index: 5, kind: input, shape index: {}]
  %s6 = inlined_call_operand.vmem [shape: f32[1,32], index: 6, kind: input, shape index: {}]
  %s7 = inlined_call_operand.hbm [shape: f32[8,256], index: 7, kind: output, shape index: {}]
  %s8 = sld [smem:[#allocation0]]
  $region66: #{tpu_custom_call.1} parent=0
    _
  %s10 = ssub.s32 1, %s8
  %s11 = scalar_select 0, %s10, %s8
  $region1: #{tpu_custom_call.1} parent=0
    #allocation7 [shape = 'u8[4096]{0}', space=vmem, size = 0x1000, scoped, tag = 'input window, operand 0, single buffered']
    #allocation8 [shape = 's32[1]{0}', space=sflag, size = 0x4, scoped, tag = 'scoped memory for tpu_custom_call.1']
    #allocation9 [shape = 's32[1]{0}', space=sflag, size = 0x4, scoped, tag = 'scoped memory for tpu_custom_call.1']
    #allocation10 [shape = 'u8[32768]{0}', space=vmem, size = 0x8000, scoped, tag = 'input window, operand 1, single buffered']
    #allocation11 [shape = 's32[1]{0}', space=sflag, size = 0x4, scoped, tag = 'scoped memory for tpu_custom_call.1']
    #allocation12 [shape = 'u8[32768]{0}', space=vmem, size = 0x8000, scoped, tag = 'input window, operand 2, single buffered']
    #allocation13 [shape = 'u8[16384]{0}', space=vmem, size = 0x4000, scoped, tag = 'input window, operand 4, single buffered']
    #allocation14 [shape = 's32[1]{0}', space=sflag, size = 0x4, scoped, tag = 'scoped memory for tpu_custom_call.1']
    #allocation15 [shape = 'u8[16384]{0}', space=vmem, size = 0x4000, scoped, tag = 'input window, operand 5, single buffered']
    #allocation16 [shape = 'u8[8192]{0}', space=vmem, size = 0x2000, scoped, tag = 'output window, operand 0, single buffered']
    %12 = vsyncpa [#allocation8], 0
    %13 = vsyncpa [#allocation11], 0
    %14 = vsyncpa [#allocation14], 0
    %15 = vsyncpa [#allocation9], 0
    // Predicated region
    $region2: #{tpu_custom_call.1} parent=1 // pred_check
      _
    $region3: #{tpu_custom_call.1} parent=1 // pred_check_branch
      %17 = sbr.rel (0) target = $region5
    $region4: #{tpu_custom_call.1} parent=1 // pred_region
      %s19 = ssub.s32 128, 128
      %20 = vsyncadd [#allocation8], %s19
      %s22 = sshll.u32 [#allocation7], 4
      %s23 = int_to_ptr.vmem [resolvable:$true] %s22
      %25 = dma.hbm_to_vmem [thread:$0]  %s0, 128, %s23, [#allocation8]
    $region5: #{tpu_custom_call.1} parent=1 // pred_fallthru
      _
    // Predicated region
    $region6: #{tpu_custom_call.1} parent=1 // pred_check
      _
    $region7: #{tpu_custom_call.1} parent=1 // pred_check_branch
      %27 = sbr.rel (0) target = $region9
    $region8: #{tpu_custom_call.1} parent=1 // pred_region
      %s29 = ssub.s32 1024, 1024
      %30 = vsyncadd [#allocation11], %s29
      %s31 = sshll.u32 [#allocation10], 4
      %s32 = int_to_ptr.vmem [resolvable:$true] %s31
      %37 = dma.hbm_to_vmem [thread:$0]  %s1, 1024, %s32, [#allocation11], 128, 128, 8
    $region9: #{tpu_custom_call.1} parent=1 // pred_fallthru
      _
    // Predicated region
    $region10: #{tpu_custom_call.1} parent=1 // pred_check
      _
    $region11: #{tpu_custom_call.1} parent=1 // pred_check_branch
      %39 = sbr.rel (0) target = $region13
    $region12: #{tpu_custom_call.1} parent=1 // pred_region
      %s41 = ssub.s32 1024, 1024
      %42 = vsyncadd [#allocation11], %s41
      %s43 = sshll.u32 [#allocation12], 4
      %s44 = int_to_ptr.vmem [resolvable:$true] %s43
      %49 = dma.hbm_to_vmem [thread:$0]  %s2, 1024, %s44, [#allocation11], 128, 128, 8
    $region13: #{tpu_custom_call.1} parent=1 // pred_fallthru
      _
    // Predicated region
    $region14: #{tpu_custom_call.1} parent=1 // pred_check
      _
    $region15: #{tpu_custom_call.1} parent=1 // pred_check_branch
      %51 = sbr.rel (0) target = $region17
    $region16: #{tpu_custom_call.1} parent=1 // pred_region
      _
    $region17: #{tpu_custom_call.1} parent=1 // pred_fallthru
      _
    // Predicated region
    $region18: #{tpu_custom_call.1} parent=1 // pred_check
      _
    $region19: #{tpu_custom_call.1} parent=1 // pred_check_branch
      %53 = sbr.rel (0) target = $region21
    $region20: #{tpu_custom_call.1} parent=1 // pred_region
      %s55 = ssub.s32 512, 512
      %56 = vsyncadd [#allocation14], %s55
      %s57 = sshll.u32 [#allocation13], 4
      %s58 = int_to_ptr.vmem [resolvable:$true] %s57
      %63 = dma.hbm_to_vmem [thread:$0]  %s4, 512, %s58, [#allocation14], 128, 128, 8
    $region21: #{tpu_custom_call.1} parent=1 // pred_fallthru
      _
    // Predicated region
    $region22: #{tpu_custom_call.1} parent=1 // pred_check
      _
    $region23: #{tpu_custom_call.1} parent=1 // pred_check_branch
      %65 = sbr.rel (0) target = $region25
    $region24: #{tpu_custom_call.1} parent=1 // pred_region
      %s67 = ssub.s32 512, 512
      %68 = vsyncadd [#allocation14], %s67
      %s69 = sshll.u32 [#allocation15], 4
      %s70 = int_to_ptr.vmem [resolvable:$true] %s69
      %75 = dma.hbm_to_vmem [thread:$0]  %s5, 512, %s70, [#allocation14], 128, 128, 8
    $region25: #{tpu_custom_call.1} parent=1 // pred_fallthru
      _
    // Predicated region
    $region26: #{tpu_custom_call.1} parent=1 // pred_check
      _
    $region27: #{tpu_custom_call.1} parent=1 // pred_check_branch
      %77 = sbr.rel (0) target = $region29
    $region28: #{tpu_custom_call.1} parent=1 // pred_region
      _
    $region29: #{tpu_custom_call.1} parent=1 // pred_fallthru
      _
    // Predicated region
    $region30: #{tpu_custom_call.1} parent=1 // pred_check
      _
    $region31: #{tpu_custom_call.1} parent=1 // pred_check_branch
      %79 = sbr.rel (0) target = $region33
    $region32: #{tpu_custom_call.1} parent=1 // pred_region
      %80 = dma.done [#allocation8], 128
    $region33: #{tpu_custom_call.1} parent=1 // pred_fallthru
      _
    // Predicated region
    $region34: #{tpu_custom_call.1} parent=1 // pred_check
      _
    $region35: #{tpu_custom_call.1} parent=1 // pred_check_branch
      %82 = sbr.rel (0) target = $region37
    $region36: #{tpu_custom_call.1} parent=1 // pred_region
      %83 = dma.done [#allocation11], 1024
    $region37: #{tpu_custom_call.1} parent=1 // pred_fallthru
      _
    // Predicated region
    $region38: #{tpu_custom_call.1} parent=1 // pred_check
      _
    $region39: #{tpu_custom_call.1} parent=1 // pred_check_branch
      %85 = sbr.rel (0) target = $region41
    $region40: #{tpu_custom_call.1} parent=1 // pred_region
      %86 = dma.done [#allocation11], 1024
    $region41: #{tpu_custom_call.1} parent=1 // pred_fallthru
      _
    // Predicated region
    $region42: #{tpu_custom_call.1} parent=1 // pred_check
      _
    $region43: #{tpu_custom_call.1} parent=1 // pred_check_branch
      %88 = sbr.rel (0) target = $region45
    $region44: #{tpu_custom_call.1} parent=1 // pred_region
      %89 = dma.done [#allocation14], 512
    $region45: #{tpu_custom_call.1} parent=1 // pred_fallthru
      _
    // Predicated region
    $region46: #{tpu_custom_call.1} parent=1 // pred_check
      _
    $region47: #{tpu_custom_call.1} parent=1 // pred_check_branch
      %91 = sbr.rel (0) target = $region49
    $region48: #{tpu_custom_call.1} parent=1 // pred_region
      %92 = dma.done [#allocation14], 512
    $region49: #{tpu_custom_call.1} parent=1 // pred_fallthru
      _
    %p93 = scmp.eq.s32.totalorder 0, 0
    // Predicated region
    $region50: #{tpu_custom_call.1} parent=1 // pred_check
      %p94 = pneg %p93
    $region51: #{tpu_custom_call.1} parent=1 // pred_check_branch
      %96 = sbr.rel (%p94) target = $region53
    $region52: #{tpu_custom_call.1} parent=1 // pred_region
      %v97 = vld [vmem:[#allocation7] sm:$0xff]
      %v98 = vld [vmem:[#allocation13] sm:$0xff]
      %v99 = vld [vmem:[#allocation13 + $0x8] sm:$0xff]
      %v100 = vld [vmem:[#allocation13 + $0x10] sm:$0xff]
      %v101 = vld [vmem:[#allocation13 + $0x18] sm:$0xff]
      %vm102 = vcmask 261120
      %v104 = vsel %vm102, %v97, 0
      %106 = vmatprep.subr.mxu0 0.0
      %107 = vmatpush1.msra.mxu0 %v98
      %108 = vmatprep.subr.mxu0 0.0
      %109 = vmatpush1.msra.mxu0 %v99
      %110 = vmatprep.subr.mxu0 0.0
      %111 = vmatpush1.msra.mxu0 %v100
      %112 = vmatprep.subr.mxu0 0.0
      %113 = vmatpush1.msra.mxu0 %v101
      %114 = vmatprep.subr.mxu0 0.0
      %115 = vmatpush1.msra.mxu0 0.0
      %116 = vmatprep.subr.mxu0 0.0
      %117 = vmatpush1.msra.mxu0 0.0
      %118 = vmatprep.subr.mxu0 0.0
      %119 = vmatpush1.msra.mxu0 0.0
      %120 = vmatprep.subr.mxu0 0.0
      %121 = vmatpush1.msra.mxu0 0.0
      %122 = vmatprep.subr.mxu0 0.0
      %123 = vmatpush1.msra.mxu0 0.0
      %124 = vmatprep.subr.mxu0 0.0
      %125 = vmatpush1.msra.mxu0 0.0
      %126 = vmatprep.subr.mxu0 0.0
      %127 = vmatpush1.msra.mxu0 0.0
      %128 = vmatprep.subr.mxu0 0.0
      %129 = vmatpush1.msra.mxu0 0.0
      %130 = vmatprep.subr.mxu0 0.0
      %131 = vmatpush1.msra.mxu0 0.0
      %132 = vmatprep.subr.mxu0 0.0
      %133 = vmatpush1.msra.mxu0 0.0
      %134 = vmatprep.subr.mxu0 0.0
      %135 = vmatpush1.msra.mxu0 0.0
      %136 = vmatprep.subr.mxu0 0.0
      %137 = vmatpush1.msra.mxu0 0.0
      %138 = vmatprep.subr.mxu0 0.0
      %139 = vmatpush1.msra.mxu0 0.0
      %140 = vmatprep.subr.mxu0 0.0
      %141 = vmatpush1.msra.mxu0 0.0
      %142 = vmatprep.subr.mxu0 0.0
      %143 = vmatpush1.msra.mxu0 0.0
      %144 = vmatprep.subr.mxu0 0.0
      %145 = vmatpush1.msra.mxu0 0.0
      %146 = vmatprep.subr.mxu0 0.0
      %147 = vmatpush1.msra.mxu0 0.0
      %148 = vmatprep.subr.mxu0 0.0
      %149 = vmatpush1.msra.mxu0 0.0
      %150 = vmatprep.subr.mxu0 0.0
      %151 = vmatpush1.msra.mxu0 0.0
      %152 = vmatprep.subr.mxu0 0.0
      %153 = vmatpush1.msra.mxu0 0.0
      %154 = vmatprep.subr.mxu0 0.0
      %155 = vmatpush1.msra.mxu0 0.0
      %156 = vmatprep.subr.mxu0 0.0
      %157 = vmatpush1.msra.mxu0 0.0
      %158 = vmatprep.subr.mxu0 0.0
      %159 = vmatpush1.msra.mxu0 0.0
      %160 = vmatprep.subr.mxu0 0.0
      %161 = vmatpush1.msra.mxu0 0.0
      %162 = vmatprep.subr.mxu0 0.0
      %163 = vmatpush1.msra.mxu0 0.0
      %164 = vmatprep.subr.mxu0 0.0
      %165 = vmatpush1.msra.mxu0 0.0
      %166 = vmatprep.subr.mxu0 0.0
      %167 = vmatpush1.msra.mxu0 0.0
      %168 = vmatprep.subr.mxu0 0.0
      %169 = vmatpush1.msra.mxu0 0.0
      %170 = vmatprep.mubr.f32.mxu0 0.0
      %171 = vmatmul.mubr.f32.gmra.mrb[0].mxu0 %v104
      %v172 = vpop.f32.mrb[0].mxu0
      %v173 = vadd.f32 0.0, %v172
      %v174 = vpop.f32.mrb[0].mxu0
      %175 = vdwg.mxu0
      %176 = vst.msk [vmem:[#allocation2] sm:$0xff] %vm102, %v173
      %vm177 = vcmask 7168
      %178 = vst.msk [vmem:[#allocation3] sm:$0xff] %vm177, -inf
      %179 = vst.msk [vmem:[#allocation4] sm:$0xff] %vm177, 0.0
      %180 = vst.msk [vmem:[#allocation5] sm:$0xff] %vm102, 0.0
    $region53: #{tpu_custom_call.1} parent=1 // pred_fallthru
      _
    %v181 = vld [vmem:[#allocation10] sm:$0xff]
    %v182 = vld [vmem:[#allocation10 + $0x8] sm:$0xff]
    %v183 = vld [vmem:[#allocation10 + $0x10] sm:$0xff]
    %v184 = vld [vmem:[#allocation10 + $0x18] sm:$0xff]
    %v185 = vld [vmem:[#allocation10 + $0x20] sm:$0xff]
    %v186 = vld [vmem:[#allocation10 + $0x28] sm:$0xff]
    %v187 = vld [vmem:[#allocation10 + $0x30] sm:$0xff]
    %v188 = vld [vmem:[#allocation10 + $0x38] sm:$0xff]
    %v189 = vld [vmem:[#allocation15] sm:$0xff]
    %v190 = vld [vmem:[#allocation15 + $0x8] sm:$0xff]
    %v191 = vld [vmem:[#allocation15 + $0x10] sm:$0xff]
    %v192 = vld [vmem:[#allocation15 + $0x18] sm:$0xff]
    %vm193 = vcmask 261120
    %v195 = vsel %vm193, %v181, 0
    %v198 = vsel %vm193, %v182, 0
    %v201 = vsel %vm193, %v183, 0
    %v204 = vsel %vm193, %v184, 0
    %v207 = vsel %vm193, %v185, 0
    %v210 = vsel %vm193, %v186, 0
    %v213 = vsel %vm193, %v187, 0
    %v216 = vsel %vm193, %v188, 0
    %218 = vmatprep.subr.mxu0 0.0
    %219 = vmatpush1.msra.mxu0 %v189
    %220 = vmatprep.subr.mxu0 0.0
    %221 = vmatpush1.msra.mxu0 %v190
    %222 = vmatprep.subr.mxu0 0.0
    %223 = vmatpush1.msra.mxu0 %v191
    %224 = vmatprep.subr.mxu0 0.0
    %225 = vmatpush1.msra.mxu0 %v192
    %226 = vmatprep.subr.mxu0 0.0
    %227 = vmatpush1.msra.mxu0 0.0
    %228 = vmatprep.subr.mxu0 0.0
    %229 = vmatpush1.msra.mxu0 0.0
    %230 = vmatprep.subr.mxu0 0.0
    %231 = vmatpush1.msra.mxu0 0.0
    %232 = vmatprep.subr.mxu0 0.0
    %233 = vmatpush1.msra.mxu0 0.0
    %234 = vmatprep.subr.mxu0 0.0
    %235 = vmatpush1.msra.mxu0 0.0
    %236 = vmatprep.subr.mxu0 0.0
    %237 = vmatpush1.msra.mxu0 0.0
    %238 = vmatprep.subr.mxu0 0.0
    %239 = vmatpush1.msra.mxu0 0.0
    %240 = vmatprep.subr.mxu0 0.0
    %241 = vmatpush1.msra.mxu0 0.0
    %242 = vmatprep.subr.mxu0 0.0
    %243 = vmatpush1.msra.mxu0 0.0
    %244 = vmatprep.subr.mxu0 0.0
    %245 = vmatpush1.msra.mxu0 0.0
    %246 = vmatprep.subr.mxu0 0.0
    %247 = vmatpush1.msra.mxu0 0.0
    %248 = vmatprep.subr.mxu0 0.0
    %249 = vmatpush1.msra.mxu0 0.0
    %250 = vmatprep.subr.mxu0 0.0
    %251 = vmatpush1.msra.mxu0 0.0
    %252 = vmatprep.subr.mxu0 0.0
    %253 = vmatpush1.msra.mxu0 0.0
    %254 = vmatprep.subr.mxu0 0.0
    %255 = vmatpush1.msra.mxu0 0.0
    %256 = vmatprep.subr.mxu0 0.0
    %257 = vmatpush1.msra.mxu0 0.0
    %258 = vmatprep.subr.mxu0 0.0
    %259 = vmatpush1.msra.mxu0 0.0
    %260 = vmatprep.subr.mxu0 0.0
    %261 = vmatpush1.msra.mxu0 0.0
    %262 = vmatprep.subr.mxu0 0.0
    %263 = vmatpush1.msra.mxu0 0.0
    %264 = vmatprep.subr.mxu0 0.0
    %265 = vmatpush1.msra.mxu0 0.0
    %266 = vmatprep.subr.mxu0 0.0
    %267 = vmatpush1.msra.mxu0 0.0
    %268 = vmatprep.subr.mxu0 0.0
    %269 = vmatpush1.msra.mxu0 0.0
    %270 = vmatprep.subr.mxu0 0.0
    %271 = vmatpush1.msra.mxu0 0.0
    %272 = vmatprep.subr.mxu0 0.0
    %273 = vmatpush1.msra.mxu0 0.0
    %274 = vmatprep.subr.mxu0 0.0
    %275 = vmatpush1.msra.mxu0 0.0
    %276 = vmatprep.subr.mxu0 0.0
    %277 = vmatpush1.msra.mxu0 0.0
    %278 = vmatprep.subr.mxu0 0.0
    %279 = vmatpush1.msra.mxu0 0.0
    %280 = vmatprep.subr.mxu0 0.0
    %281 = vmatpush1.msra.mxu0 0.0
    %282 = vmatprep.mubr.f32.mxu0 0.0
    %283 = vmatmul.mubr.f32.gmra.mrb[0].mxu0 %v195
    %v284 = vpop.f32.mrb[0].mxu0
    %v285 = vadd.f32 0.0, %v284
    %v286 = vpop.f32.mrb[0].mxu0
    %287 = vmatprep.mubr.f32.mxu0 0.0
    %288 = vmatmul.mubr.f32.gmra.mrb[0].mxu0 %v198
    %v289 = vpop.f32.mrb[0].mxu0
    %v290 = vadd.f32 0.0, %v289
    %v291 = vpop.f32.mrb[0].mxu0
    %292 = vmatprep.mubr.f32.mxu0 0.0
    %293 = vmatmul.mubr.f32.gmra.mrb[0].mxu0 %v201
    %v294 = vpop.f32.mrb[0].mxu0
    %v295 = vadd.f32 0.0, %v294
    %v296 = vpop.f32.mrb[0].mxu0
    %297 = vmatprep.mubr.f32.mxu0 0.0
    %298 = vmatmul.mubr.f32.gmra.mrb[0].mxu0 %v204
    %v299 = vpop.f32.mrb[0].mxu0
    %v300 = vadd.f32 0.0, %v299
    %v301 = vpop.f32.mrb[0].mxu0
    %302 = vmatprep.mubr.f32.mxu0 0.0
    %303 = vmatmul.mubr.f32.gmra.mrb[0].mxu0 %v207
    %v304 = vpop.f32.mrb[0].mxu0
    %v305 = vadd.f32 0.0, %v304
    %v306 = vpop.f32.mrb[0].mxu0
    %307 = vmatprep.mubr.f32.mxu0 0.0
    %308 = vmatmul.mubr.f32.gmra.mrb[0].mxu0 %v210
    %v309 = vpop.f32.mrb[0].mxu0
    %v310 = vadd.f32 0.0, %v309
    %v311 = vpop.f32.mrb[0].mxu0
    %312 = vmatprep.mubr.f32.mxu0 0.0
    %313 = vmatmul.mubr.f32.gmra.mrb[0].mxu0 %v213
    %v314 = vpop.f32.mrb[0].mxu0
    %v315 = vadd.f32 0.0, %v314
    %v316 = vpop.f32.mrb[0].mxu0
    %317 = vmatprep.mubr.f32.mxu0 0.0
    %318 = vmatmul.mubr.f32.gmra.mrb[0].mxu0 %v216
    %v319 = vpop.f32.mrb[0].mxu0
    %v320 = vadd.f32 0.0, %v319
    %v321 = vpop.f32.mrb[0].mxu0
    %322 = vdwg.mxu0
    %v323 = vld [vmem:[#allocation2] sm:$0xff]
    %v325 = vcombine.high %v323, %v323
    %v327 = vunpack.c.l.s4 1966171168
    %v328 = vunpack.c.0.s8 %v327
    %v329 = vlaneseq
    %v330 = vshrl.u32 %v329, 7
    %v331 = vsub.s32 %v328, %v330
    %v332 = vrot.slane %v323, %v331
    %v334 = vunpack.c.l.s4 1966171168
    %v335 = vunpack.c.0.s8 %v334
    %v336 = vlaneseq
    %v337 = vshrl.u32 %v336, 7
    %v338 = vsub.s32 %v335, %v337
    %v339 = vrot.slane %v325, %v338
    %v340 = vcombine.high %v332, %v332
    %v341 = vcombine.high %v339, %v339
    %v343 = vunpack.c.l.s4 1966171168
    %v344 = vunpack.c.0.s8 %v343
    %v345 = vlaneseq
    %v346 = vshrl.u32 %v345, 7
    %v347 = vsub.s32 %v344, %v346
    %v348 = vrot.slane %v332, %v347
    %v350 = vunpack.c.l.s4 1966171168
    %v351 = vunpack.c.0.s8 %v350
    %v352 = vlaneseq
    %v353 = vshrl.u32 %v352, 7
    %v354 = vsub.s32 %v351, %v353
    %v355 = vrot.slane %v339, %v354
    %v357 = vunpack.c.l.s4 1966171168
    %v358 = vunpack.c.0.s8 %v357
    %v359 = vlaneseq
    %v360 = vshrl.u32 %v359, 7
    %v361 = vsub.s32 %v358, %v360
    %v362 = vrot.slane %v340, %v361
    %v364 = vunpack.c.l.s4 1966171168
    %v365 = vunpack.c.0.s8 %v364
    %v366 = vlaneseq
    %v367 = vshrl.u32 %v366, 7
    %v368 = vsub.s32 %v365, %v367
    %v369 = vrot.slane %v341, %v368
    %v370 = vcombine.high %v348, %v348
    %v371 = vcombine.high %v355, %v355
    %v372 = vcombine.high %v362, %v362
    %v373 = vcombine.high %v369, %v369
    %v374 = vlaneseq
    %v375 = vshrl.u32 %v374, 7
    %v376 = vsub.s32 0, %v375
    %v377 = vrot.slane %v348, %v376
    %v378 = vlaneseq
    %v379 = vshrl.u32 %v378, 7
    %v380 = vsub.s32 0, %v379
    %v381 = vrot.slane %v362, %v380
    %v382 = vlaneseq
    %v383 = vshrl.u32 %v382, 7
    %v384 = vsub.s32 0, %v383
    %v385 = vrot.slane %v370, %v384
    %v386 = vlaneseq
    %v387 = vshrl.u32 %v386, 7
    %v388 = vsub.s32 0, %v387
    %v389 = vrot.slane %v372, %v388
    %v390 = vlaneseq
    %v391 = vshrl.u32 %v390, 7
    %v392 = vsub.s32 0, %v391
    %v393 = vrot.slane %v355, %v392
    %v394 = vlaneseq
    %v395 = vshrl.u32 %v394, 7
    %v396 = vsub.s32 0, %v395
    %v397 = vrot.slane %v369, %v396
    %v398 = vlaneseq
    %v399 = vshrl.u32 %v398, 7
    %v400 = vsub.s32 0, %v399
    %v401 = vrot.slane %v371, %v400
    %v402 = vlaneseq
    %v403 = vshrl.u32 %v402, 7
    %v404 = vsub.s32 0, %v403
    %v405 = vrot.slane %v373, %v404
    %v414 = vadd.f32 %v377, %v285
    %v415 = vadd.f32 %v381, %v290
    %v416 = vadd.f32 %v385, %v295
    %v417 = vadd.f32 %v389, %v300
    %v418 = vadd.f32 %v393, %v305
    %v419 = vadd.f32 %v397, %v310
    %v420 = vadd.f32 %v401, %v315
    %v421 = vadd.f32 %v405, %v320
    %v422 = vtanh.pop %v414
    %v423 = vtanh.pop %v415
    %v424 = vtanh.pop %v416
    %v425 = vtanh.pop %v417
    %v426 = vtanh.pop %v418
    %v427 = vtanh.pop %v419
    %v428 = vtanh.pop %v420
    %v429 = vtanh.pop %v421
    %v430 = vld [vmem:[%s6] sm:$0x1]
    %v432 = vlaneseq
    %v433 = vshrl.u32 %v432, 7
    %v434 = vsub.s32 0, %v433
    %v435 = vrot.slane %v430, %v434
    %v437 = vmul.f32 %v422, %v435
    %v438 = vmul.f32 %v423, %v435
    %v439 = vmul.f32 %v424, %v435
    %v440 = vmul.f32 %v425, %v435
    %v441 = vmul.f32 %v426, %v435
    %v442 = vmul.f32 %v427, %v435
    %v443 = vmul.f32 %v428, %v435
    %v444 = vmul.f32 %v429, %v435
    %v445 = vsel %vm193, %v437, 0.0
    %446 = vadd.xlane.f32.xlu0 %v445
    %v447 = vpop.xlane.xlu0 %446
    %v448 = vsel %vm193, %v438, 0.0
    %449 = vadd.xlane.f32.xlu0 %v448
    %v450 = vpop.xlane.xlu0 %449
    %v451 = vsel %vm193, %v439, 0.0
    %452 = vadd.xlane.f32.xlu0 %v451
    %v453 = vpop.xlane.xlu0 %452
    %v454 = vsel %vm193, %v440, 0.0
    %455 = vadd.xlane.f32.xlu0 %v454
    %v456 = vpop.xlane.xlu0 %455
    %v457 = vsel %vm193, %v441, 0.0
    %458 = vadd.xlane.f32.xlu0 %v457
    %v459 = vpop.xlane.xlu0 %458
    %v460 = vsel %vm193, %v442, 0.0
    %461 = vadd.xlane.f32.xlu0 %v460
    %v462 = vpop.xlane.xlu0 %461
    %v463 = vsel %vm193, %v443, 0.0
    %464 = vadd.xlane.f32.xlu0 %v463
    %v465 = vpop.xlane.xlu0 %464
    %v466 = vsel %vm193, %v444, 0.0
    %467 = vadd.xlane.f32.xlu0 %v466
    %v468 = vpop.xlane.xlu0 %467
    %v469 = vld [vmem:[%s3] sm:$0xff]
    %vm470 = vcmp.eq.s32.totalorder %v469, 0
    %v479 = vlaneseq
    %v480 = vand.u32 %v479, 127
    %v481 = vlaneseq
    %v482 = vshrl.u32 %v481, 7
    %v483 = vsub.s32 %v480, %v482
    %v484 = vrot.slane %v447, %v483
    %v485 = vlaneseq
    %v486 = vshrl.u32 %v485, 7
    %v487 = vsub.s32 %v480, %v486
    %v488 = vrot.slane %v450, %v487
    %v489 = vlaneseq
    %v490 = vshrl.u32 %v489, 7
    %v491 = vsub.s32 %v480, %v490
    %v492 = vrot.slane %v453, %v491
    %v493 = vlaneseq
    %v494 = vshrl.u32 %v493, 7
    %v495 = vsub.s32 %v480, %v494
    %v496 = vrot.slane %v456, %v495
    %v497 = vlaneseq
    %v498 = vshrl.u32 %v497, 7
    %v499 = vsub.s32 %v480, %v498
    %v500 = vrot.slane %v459, %v499
    %v501 = vlaneseq
    %v502 = vshrl.u32 %v501, 7
    %v503 = vsub.s32 %v480, %v502
    %v504 = vrot.slane %v462, %v503
    %v505 = vlaneseq
    %v506 = vshrl.u32 %v505, 7
    %v507 = vsub.s32 %v480, %v506
    %v508 = vrot.slane %v465, %v507
    %v509 = vlaneseq
    %v510 = vshrl.u32 %v509, 7
    %v511 = vsub.s32 %v480, %v510
    %v512 = vrot.slane %v468, %v511
    %vm513 = vcmask 1041409
    %v514 = vsel %vm513, %v488, %v484
    %vm515 = vcmask 1042434
    %v516 = vsel %vm515, %v492, %v514
    %vm517 = vcmask 1043459
    %v518 = vsel %vm517, %v496, %v516
    %vm519 = vcmask 1044484
    %v520 = vsel %vm519, %v500, %v518
    %vm521 = vcmask 1045509
    %v522 = vsel %vm521, %v504, %v520
    %vm523 = vcmask 1046534
    %v524 = vsel %vm523, %v508, %v522
    %vm525 = vcmask 1047559
    %v526 = vsel %vm525, %v512, %v524
    %v528 = vsel %vm470, -1e+10, %v526
    %vm529 = vcmask 64512
    %530 = vst.msk [vmem:[#allocation6] sm:$0xff] %vm529, %v528
    %v531 = vld [vmem:[#allocation3] sm:$0xff]
    %v532 = vsel %vm529, %v528, -inf
    %533 = vmax.xlane.f32.xlu0 %v532
    %v534 = vpop.xlane.xlu0 %533
    %v535 = vmax.f32 %v531, %v534
    %v536 = vsub.f32 %v531, %v535
    %v537 = vmul.f32 %v536, 1.442695
    %v538 = vpow.pop %v537
    %540 = vset.pattern.permute.xlu0 0
    %541 = vperm.xlu0 %540, %v535
    %v542 = vpop.permute.xlu0 %541
    %v544 = vsub.f32 %v528, %v542
    %v545 = vmul.f32 %v544, 1.442695
    %v546 = vpow.pop %v545
    %v547 = vld [vmem:[#allocation4] sm:$0xff]
    %v548 = vmul.f32 %v538, %v547
    %v549 = vsel %vm529, %v546, 0.0
    %550 = vadd.xlane.f32.xlu0 %v549
    %v551 = vpop.xlane.xlu0 %550
    %v552 = vadd.f32 %v548, %v551
    %vm553 = vcmask 7168
    %554 = vst.msk [vmem:[#allocation4] sm:$0xff] %vm553, %v552
    %v555 = vld [vmem:[#allocation12] sm:$0xff]
    %v556 = vld [vmem:[#allocation12 + $0x8] sm:$0xff]
    %v557 = vld [vmem:[#allocation12 + $0x10] sm:$0xff]
    %v558 = vld [vmem:[#allocation12 + $0x18] sm:$0xff]
    %v559 = vld [vmem:[#allocation12 + $0x20] sm:$0xff]
    %v560 = vld [vmem:[#allocation12 + $0x28] sm:$0xff]
    %v561 = vld [vmem:[#allocation12 + $0x30] sm:$0xff]
    %v562 = vld [vmem:[#allocation12 + $0x38] sm:$0xff]
    %v563 = vld [vmem:[#allocation5] sm:$0xff]
    %565 = vset.pattern.permute.xlu0 0
    %566 = vperm.xlu0 %565, %v538
    %v567 = vpop.permute.xlu0 %566
    %v569 = vmul.f32 %v567, %v563
    %v570 = vlaneseq
    %v571 = vshrl.u32 %v570, 7
    %v572 = vsub.s32 0, %v571
    %v573 = vrot.slane %v546, %v572
    %575 = vbcast.lane.b32.xlu0 %v573, 256
    %v576 = vpop.permute.xlu0 %575
    %v577 = vlaneseq
    %v578 = vshrl.u32 %v577, 7
    %v579 = vsub.s32 1, %v578
    %v580 = vrot.slane %v546, %v579
    %582 = vbcast.lane.b32.xlu0 %v580, 256
    %v583 = vpop.permute.xlu0 %582
    %v584 = vlaneseq
    %v585 = vshrl.u32 %v584, 7
    %v586 = vsub.s32 2, %v585
    %v587 = vrot.slane %v546, %v586
    %589 = vbcast.lane.b32.xlu0 %v587, 256
    %v590 = vpop.permute.xlu0 %589
    %v591 = vlaneseq
    %v592 = vshrl.u32 %v591, 7
    %v593 = vsub.s32 3, %v592
    %v594 = vrot.slane %v546, %v593
    %596 = vbcast.lane.b32.xlu0 %v594, 256
    %v597 = vpop.permute.xlu0 %596
    %v598 = vlaneseq
    %v599 = vshrl.u32 %v598, 7
    %v600 = vsub.s32 4, %v599
    %v601 = vrot.slane %v546, %v600
    %603 = vbcast.lane.b32.xlu0 %v601, 256
    %v604 = vpop.permute.xlu0 %603
    %v605 = vlaneseq
    %v606 = vshrl.u32 %v605, 7
    %v607 = vsub.s32 5, %v606
    %v608 = vrot.slane %v546, %v607
    %610 = vbcast.lane.b32.xlu0 %v608, 256
    %v611 = vpop.permute.xlu0 %610
    %v612 = vlaneseq
    %v613 = vshrl.u32 %v612, 7
    %v614 = vsub.s32 6, %v613
    %v615 = vrot.slane %v546, %v614
    %617 = vbcast.lane.b32.xlu0 %v615, 256
    %v618 = vpop.permute.xlu0 %617
    %v619 = vlaneseq
    %v620 = vshrl.u32 %v619, 7
    %v621 = vsub.s32 7, %v620
    %v622 = vrot.slane %v546, %v621
    %624 = vbcast.lane.b32.xlu0 %v622, 256
    %v625 = vpop.permute.xlu0 %624
    %v626 = vmul.f32 %v576, %v555
    %v627 = vmul.f32 %v583, %v556
    %v628 = vmul.f32 %v590, %v557
    %v629 = vmul.f32 %v597, %v558
    %v630 = vmul.f32 %v604, %v559
    %v631 = vmul.f32 %v611, %v560
    %v632 = vmul.f32 %v618, %v561
    %v633 = vmul.f32 %v625, %v562
    %v634 = vsel %vm193, %v626, 0.0
    %v635 = vrot.slane %v634, 4
    %v636 = vadd.f32 %v634, %v635
    %v637 = vrot.slane %v636, 2
    %v638 = vadd.f32 %v636, %v637
    %v639 = vrot.slane %v638, 1
    %v640 = vadd.f32 %v638, %v639
    %v641 = vsel %vm193, %v627, 0.0
    %v642 = vrot.slane %v641, 4
    %v643 = vadd.f32 %v641, %v642
    %v644 = vrot.slane %v643, 2
    %v645 = vadd.f32 %v643, %v644
    %v646 = vrot.slane %v645, 1
    %v647 = vadd.f32 %v645, %v646
    %v648 = vsel %vm193, %v628, 0.0
    %v649 = vrot.slane %v648, 4
    %v650 = vadd.f32 %v648, %v649
    %v651 = vrot.slane %v650, 2
    %v652 = vadd.f32 %v650, %v651
    %v653 = vrot.slane %v652, 1
    %v654 = vadd.f32 %v652, %v653
    %v655 = vsel %vm193, %v629, 0.0
    %v656 = vrot.slane %v655, 4
    %v657 = vadd.f32 %v655, %v656
    %v658 = vrot.slane %v657, 2
    %v659 = vadd.f32 %v657, %v658
    %v660 = vrot.slane %v659, 1
    %v661 = vadd.f32 %v659, %v660
    %v662 = vsel %vm193, %v630, 0.0
    %v663 = vrot.slane %v662, 4
    %v664 = vadd.f32 %v662, %v663
    %v665 = vrot.slane %v664, 2
    %v666 = vadd.f32 %v664, %v665
    %v667 = vrot.slane %v666, 1
    %v668 = vadd.f32 %v666, %v667
    %v669 = vsel %vm193, %v631, 0.0
    %v670 = vrot.slane %v669, 4
    %v671 = vadd.f32 %v669, %v670
    %v672 = vrot.slane %v671, 2
    %v673 = vadd.f32 %v671, %v672
    %v674 = vrot.slane %v673, 1
    %v675 = vadd.f32 %v673, %v674
    %v676 = vsel %vm193, %v632, 0.0
    %v677 = vrot.slane %v676, 4
    %v678 = vadd.f32 %v676, %v677
    %v679 = vrot.slane %v678, 2
    %v680 = vadd.f32 %v678, %v679
    %v681 = vrot.slane %v680, 1
    %v682 = vadd.f32 %v680, %v681
    %v683 = vsel %vm193, %v633, 0.0
    %v684 = vrot.slane %v683, 4
    %v685 = vadd.f32 %v683, %v684
    %v686 = vrot.slane %v685, 2
    %v687 = vadd.f32 %v685, %v686
    %v688 = vrot.slane %v687, 1
    %v689 = vadd.f32 %v687, %v688
    %v698 = vsel %vm513, %v647, %v640
    %v699 = vsel %vm515, %v654, %v698
    %v700 = vsel %vm517, %v661, %v699
    %v701 = vsel %vm519, %v668, %v700
    %v702 = vsel %vm521, %v675, %v701
    %v703 = vsel %vm523, %v682, %v702
    %v704 = vsel %vm525, %v689, %v703
    %v706 = vadd.f32 %v569, %v704
    %707 = vst.msk [vmem:[#allocation5] sm:$0xff] %vm193, %v706
    %708 = vst.msk [vmem:[#allocation3] sm:$0xff] %vm553, %v535
    // Predicated region
    $region54: #{tpu_custom_call.1} parent=1 // pred_check
      %p709 = pneg %p93
    $region55: #{tpu_custom_call.1} parent=1 // pred_check_branch
      %711 = sbr.rel (%p709) target = $region57
    $region56: #{tpu_custom_call.1} parent=1 // pred_region
      %v712 = vld [vmem:[#allocation4] sm:$0xff]
      %v713 = vrcp.pop %v712
      %v714 = vld [vmem:[#allocation5] sm:$0xff]
      %716 = vset.pattern.permute.xlu0 0
      %717 = vperm.xlu0 %716, %v713
      %v718 = vpop.permute.xlu0 %717
      %v720 = vmul.f32 %v714, %v718
      %v721 = vld [vmem:[#allocation6] sm:$0xff]
      %v722 = vld [vmem:[#allocation3] sm:$0xff]
      %724 = vset.pattern.permute.xlu0 0
      %725 = vperm.xlu0 %724, %v722
      %v726 = vpop.permute.xlu0 %725
      %v728 = vsub.f32 %v721, %v726
      %v729 = vmul.f32 %v728, 1.442695
      %v730 = vpow.pop %v729
      %v731 = vmul.f32 %v730, %v718
      %v732 = vsel %vm193, %v720, 0.0
      %v733 = vsel %vm529, %v731, 0.0
      %734 = vst [vmem:[#allocation16] sm:$0xff] %v732
      %735 = vst [vmem:[#allocation16 + $0x8] sm:$0xff] %v733
    $region57: #{tpu_custom_call.1} parent=1 // pred_fallthru
      _
    // Predicated region
    $region58: #{tpu_custom_call.1} parent=1 // pred_check
      _
    $region59: #{tpu_custom_call.1} parent=1 // pred_check_branch
      %737 = sbr.rel (0) target = $region61
    $region60: #{tpu_custom_call.1} parent=1 // pred_region
      %s739 = ssub.s32 256, 256
      %740 = vsyncadd [#allocation9], %s739
      %s742 = sshll.u32 [#allocation16], 4
      %s743 = int_to_ptr.vmem [resolvable:$true] %s742
      %745 = dma.vmem_to_hbm [thread:$0]  %s743, 256, %s7, [#allocation9]
    $region61: #{tpu_custom_call.1} parent=1 // pred_fallthru
      _
    // Predicated region
    $region62: #{tpu_custom_call.1} parent=1 // pred_check
      _
    $region63: #{tpu_custom_call.1} parent=1 // pred_check_branch
      %747 = sbr.rel (0) target = $region65
    $region64: #{tpu_custom_call.1} parent=1 // pred_region
      %748 = dma.done [#allocation9], 256
    $region65: #{tpu_custom_call.1} parent=1 // pred_fallthru
      _
    %749 = vsyncpa [#allocation8], 1
    %750 = vsyncpa [#allocation11], 1
    %751 = vsyncpa [#allocation14], 1
    %752 = vsyncpa [#allocation9], 1

</llo_original>
